<compile_context>
chip_gen: v7x
topology: tpu7x:2x2x1
jax: 0.10.0
libtpu: 0.0.40
codegen_flags: <defaults>
</compile_context>

<pallas_src>
import functools
import math

import jax
import jax.numpy as jnp
from jax.experimental import pallas as pl
from jax.experimental.pallas import tpu as pltpu

BN_EPS = 1e-5
LAYER_CFG = ((64, 1), (128, 2), (256, 2), (512, 2))   # (planes, stride) per layer


def _round_up(x, m):
    return (x + m - 1) // m * m


# --------------------------- Pallas kernels --------------------------------

def _matmul_bn_act_single_kernel(*refs, relu, has_res):
    """Single-K-step tile: register-accumulate, fused epilogue, one bf16 store."""
    if has_res:
        x_ref, w_ref, s_ref, b_ref, r_ref, o_ref = refs
    else:
        x_ref, w_ref, s_ref, b_ref, o_ref = refs
        r_ref = None
    acc = jnp.dot(x_ref[...], w_ref[...], preferred_element_type=jnp.float32)
    y = acc * s_ref[...] + b_ref[...]
    if has_res:
        y = y + r_ref[...].astype(jnp.float32)
    if relu:
        y = jnp.maximum(y, 0.0)
    o_ref[...] = y.astype(o_ref.dtype)


def _matmul_bn_act_multi_kernel(*refs, relu, has_res):
    """Fallback for K > max_tk: f32 VMEM scratch accumulator across K steps."""
    if has_res:
        x_ref, w_ref, s_ref, b_ref, r_ref, o_ref, acc_ref = refs
    else:
        x_ref, w_ref, s_ref, b_ref, o_ref, acc_ref = refs
        r_ref = None
    k = pl.program_id(2)

    @pl.when(k == 0)
    def _():
        acc_ref[...] = jnp.zeros_like(acc_ref)

    acc_ref[...] += jnp.dot(x_ref[...], w_ref[...],
                            preferred_element_type=jnp.float32)

    @pl.when(k == pl.num_programs(2) - 1)
    def _():
        y = acc_ref[...] * s_ref[...] + b_ref[...]
        if has_res:
            y = y + r_ref[...].astype(jnp.float32)
        if relu:
            y = jnp.maximum(y, 0.0)
        o_ref[...] = y.astype(o_ref.dtype)


def matmul_bn_act(x, w, scale, bias, *, relu, residual=None,
                  tm=256, tn=None, max_tk=4608, out_dtype=jnp.bfloat16):
    """act((x @ w) * scale + bias (+ residual)) -> bf16.

    x: (M, K), w: (K, N), scale/bias: (N,), residual: (M, N) or None.
    MXU operands are bf16, accumulation is f32, epilogue in f32, store bf16.
    """
    M, K = x.shape
    Kw, N = w.shape
    assert K == Kw

    tm = min(tm, _round_up(M, 8))
    if tn is None:
        # v7x: prefer >=2 blocks on the N ("parallel") axis on the 256/512
        # channel layers so both TensorCores get work (no effect on v5e/v6e).
        tn = 128 if N >= 256 else _round_up(N, 128)
    tn = min(tn, _round_up(N, 128))
    Mp = _round_up(M, tm)
    Np = _round_up(N, tn)

    # K pad only to the sublane multiple of 8 (conv1: 147 -> 152); otherwise a
    # full-extent K block is legal and the extra HBM pad pass is skipped.
    Kp = _round_up(K, 8)
    single_k = Kp <= max_tk
    if single_k:
        tk = Kp
    else:
        tk = max(128, _round_up(max_tk, 128) - 128 if max_tk % 128 else max_tk)
        tk = min(tk, _round_up(K, 128))
        Kp = _round_up(K, tk)

    xb = x.astype(jnp.bfloat16)
    wb = w.astype(jnp.bfloat16)
    if (Mp, Kp) != (M, K):
        xb = jnp.pad(xb, ((0, Mp - M), (0, Kp - K)))
    if (Kp, Np) != (K, N):
        wb = jnp.pad(wb, ((0, Kp - K), (0, Np - N)))
    sp = scale if Np == N else jnp.pad(scale, (0, Np - N))
    bp = bias if Np == N else jnp.pad(bias, (0, Np - N))
    sp = sp.reshape(1, Np).astype(jnp.float32)
    bp = bp.reshape(1, Np).astype(jnp.float32)

    has_res = residual is not None
    inputs = [xb, wb, sp, bp]
    if has_res:
        rb = residual.astype(jnp.bfloat16)      # keep residual DMA half-width
        if (Mp, Np) != (M, N):
            rb = jnp.pad(rb, ((0, Mp - M), (0, Np - N)))
        inputs.append(rb)

    if single_k:
        in_specs = [
            pl.BlockSpec((tm, Kp), lambda i, j: (i, 0)),
            pl.BlockSpec((Kp, tn), lambda i, j: (0, j)),
            pl.BlockSpec((1, tn), lambda i, j: (0, j)),
            pl.BlockSpec((1, tn), lambda i, j: (0, j)),
        ]
        if has_res:
            in_specs.append(pl.BlockSpec((tm, tn), lambda i, j: (i, j)))
        kernel = functools.partial(_matmul_bn_act_single_kernel,
                                   relu=relu, has_res=has_res)
        out = pl.pallas_call(
            kernel,
            out_shape=jax.ShapeDtypeStruct((Mp, Np), out_dtype),
            grid_spec=pltpu.PrefetchScalarGridSpec(
                num_scalar_prefetch=0,
                grid=(Mp // tm, Np // tn),
                in_specs=in_specs,
                out_specs=pl.BlockSpec((tm, tn), lambda i, j: (i, j)),
            ),
            compiler_params=pltpu.CompilerParams(
                dimension_semantics=("parallel", "parallel")),
        )(*inputs)
    else:
        in_specs = [
            pl.BlockSpec((tm, tk), lambda i, j, k: (i, k)),
            pl.BlockSpec((tk, tn), lambda i, j, k: (k, j)),
            pl.BlockSpec((1, tn), lambda i, j, k: (0, j)),
            pl.BlockSpec((1, tn), lambda i, j, k: (0, j)),
        ]
        if has_res:
            in_specs.append(pl.BlockSpec((tm, tn), lambda i, j, k: (i, j)))
        kernel = functools.partial(_matmul_bn_act_multi_kernel,
                                   relu=relu, has_res=has_res)
        out = pl.pallas_call(
            kernel,
            out_shape=jax.ShapeDtypeStruct((Mp, Np), out_dtype),
            grid_spec=pltpu.PrefetchScalarGridSpec(
                num_scalar_prefetch=0,
                grid=(Mp // tm, Np // tn, Kp // tk),
                in_specs=in_specs,
                out_specs=pl.BlockSpec((tm, tn), lambda i, j, k: (i, j)),
                scratch_shapes=[pltpu.VMEM((tm, tn), jnp.float32)],
            ),
            compiler_params=pltpu.CompilerParams(
                dimension_semantics=("parallel", "parallel", "arbitrary")),
        )(*inputs)

    if (Mp, Np) != (M, N):
        out = out[:M, :N]
    return out


# ------------------------------ glue ---------------------------------------

def maxpool2d(x, *, kernel=3, stride=2, padding=1):
    """MaxPool2d(kernel, stride, padding) on NHWC (bf16).

    Fused tree of jnp.maximum over the k*k strided slices (no patch
    materialization, no extra kernel launch) — per perf review.
    """
    N, H, W, C = x.shape
    Ho = (H + 2 * padding - kernel) // stride + 1
    Wo = (W + 2 * padding - kernel) // stride + 1
    xp = jnp.pad(x, ((0, 0), (padding, padding), (padding, padding), (0, 0)),
                 constant_values=-jnp.inf)
    out = None
    for dh in range(kernel):
        for dw in range(kernel):
            sl = xp[:, dh:dh + stride * (Ho - 1) + 1:stride,
                    dw:dw + stride * (Wo - 1) + 1:stride, :]
            out = sl if out is None else jnp.maximum(out, sl)
    return out


def _im2col(x, kh, kw, stride, padding):
    N, H, W, C = x.shape
    Ho = (H + 2 * padding - kh) // stride + 1
    Wo = (W + 2 * padding - kw) // stride + 1
    xp = jnp.pad(x, ((0, 0), (padding, padding), (padding, padding), (0, 0)))
    cols = []
    for dh in range(kh):
        for dw in range(kw):
            cols.append(xp[:, dh:dh + stride * (Ho - 1) + 1:stride,
                            dw:dw + stride * (Wo - 1) + 1:stride, :])
    patches = jnp.concatenate(cols, axis=-1)        # (N, Ho, Wo, kh*kw*C)
    return patches.reshape(N * Ho * Wo, kh * kw * C), Ho, Wo


def conv_bn_act(x, w_oihw, scale, bias, *, stride, padding, relu,
                residual=None):
    Cout, Cin, kh, kw = w_oihw.shape
    N = x.shape[0]
    # Activations are already bf16 (kernel emits bf16); this cast is a no-op
    # except for the very first conv's f32 input.
    patches, Ho, Wo = _im2col(x.astype(jnp.bfloat16), kh, kw, stride, padding)
    wf = jnp.transpose(w_oihw, (2, 3, 1, 0)).reshape(kh * kw * Cin, Cout)
    res = residual.reshape(N * Ho * Wo, Cout) if residual is not None else None
    y = matmul_bn_act(patches, wf, scale, bias, relu=relu, residual=res)
    return y.reshape(N, Ho, Wo, Cout)


def _bn_affine(c):
    # eval-mode BN with mean=0, var=1, gamma=1, beta=0 -> per-channel scale/shift
    scale = jnp.full((c,), 1.0 / math.sqrt(1.0 + BN_EPS), jnp.float32)
    bias = jnp.zeros((c,), jnp.float32)
    return scale, bias


def basic_block(x, blk, stride):
    planes = blk["conv1_w"].shape[0]
    s, b = _bn_affine(planes)
    if "down_w" in blk:
        identity = conv_bn_act(x, blk["down_w"], s, b, stride=stride,
                               padding=0, relu=False)
    else:
        identity = x                                 # already bf16
    out = conv_bn_act(x, blk["conv1_w"], s, b, stride=stride, padding=1,
                      relu=True)
    # conv2 + bn2 + residual add + relu fused into one kernel epilogue
    out = conv_bn_act(out, blk["conv2_w"], s, b, stride=1, padding=1,
                      relu=True, residual=identity)
    return out


def forward(params, x_nchw):
    # NOTE(perf): at batch=2 / 32x32 the conv M values are {512,128,32,8,2};
    # the MXU is row-starved and the net is weight-DMA / glue bound — raise
    # batch (or fuse more spatial work per call) before further MXU tuning.
    x = jnp.transpose(x_nchw, (0, 2, 3, 1)).astype(jnp.bfloat16)   # NCHW -> NHWC
    s, b = _bn_affine(64)
    x = conv_bn_act(x, params["conv1_w"], s, b, stride=2, padding=3, relu=True)
    x = maxpool2d(x, kernel=3, stride=2, padding=1)
    for li, (_, stride) in enumerate(LAYER_CFG):
        blocks = params["layers"][li]
        x = basic_block(x, blocks[0], stride)
        x = basic_block(x, blocks[1], 1)
    feat = jnp.mean(x.astype(jnp.float32), axis=(1, 2))   # AdaptiveAvgPool2d((1,1)) + flatten
    # Tiny (batch x 512) @ (512 x n_classes) FC via plain jnp.dot (per perf
    # review: pallas_call launch + pad/slice glue dominates at M=N=2).
    logits = feat @ params["fc_w"].T.astype(jnp.float32) + params["fc_b"]
    return logits


def init_params(key, n_classes=2):
    def kaiming_conv(k, cout, cin, kh, kw):
        fan_out = kh * kw * cout                   # mode='fan_out', relu
        std = math.sqrt(2.0 / fan_out)
        return std * jax.random.normal(k, (cout, cin, kh, kw), jnp.float32)

    keys = iter(jax.random.split(key, 64))
    params = {"conv1_w": kaiming_conv(next(keys), 64, 3, 7, 7)}
    inplanes = 64
    layers = []
    for planes, stride in LAYER_CFG:
        blocks = []
        for bi in range(2):
            s = stride if bi == 0 else 1
            blk = {
                "conv1_w": kaiming_conv(next(keys), planes, inplanes, 3, 3),
                "conv2_w": kaiming_conv(next(keys), planes, planes, 3, 3),
            }
            if bi == 0 and (s != 1 or inplanes != planes):
                blk["down_w"] = kaiming_conv(next(keys), planes, inplanes, 1, 1)
            inplanes = planes
            blocks.append(blk)
        layers.append(blocks)
    params["layers"] = layers
    kfc = 1.0 / math.sqrt(512.0)                   # nn.Linear default init
    params["fc_w"] = jax.random.uniform(next(keys), (n_classes, 512),
                                        jnp.float32, -kfc, kfc)
    params["fc_b"] = jax.random.uniform(next(keys), (n_classes,),
                                        jnp.float32, -kfc, kfc)
    return params


if __name__ == "__main__":
    key = jax.random.PRNGKey(0)
    pkey, xkey = jax.random.split(key)
    params = init_params(pkey, n_classes=2)
    x = jax.random.normal(xkey, (2, 3, 32, 32), jnp.float32)   # NCHW like PyTorch
    logits = jax.block_until_ready(forward(params, x))
    assert logits.shape == (2, 2) and logits.dtype == jnp.float32
    print("KERNEL_OK")
</pallas_src>

<mosaic_0001>
module attributes {stable_mosaic.version = 11 : i64} {
  func.func @_matmul_bn_act_single_kernel(%arg0: i32, %arg1: i32, %arg2: memref<256x152xbf16, #tpu.memory_space<vmem>>, %arg3: memref<152x128xbf16, #tpu.memory_space<vmem>>, %arg4: memref<1x128xf32, #tpu.memory_space<vmem>>, %arg5: memref<1x128xf32, #tpu.memory_space<vmem>>, %arg6: memref<256x128xbf16, #tpu.memory_space<vmem>>) attributes {dimension_semantics = [#tpu.dimension_semantics<parallel>, #tpu.dimension_semantics<parallel>], iteration_bounds = array<i64: 2, 1>, scalar_prefetch = 0 : i64, scratch_operands = 0 : i64, tpu.core_type = #tpu.core_type<tc>, window_params = [{transform_indices = @transform_0, window_bounds = array<i64: 256, 152>}, {transform_indices = @transform_1, window_bounds = array<i64: 152, 128>}, {transform_indices = @transform_2, window_bounds = array<i64: 1, 128>}, {transform_indices = @transform_3, window_bounds = array<i64: 1, 128>}, {transform_indices = @transform_4, window_bounds = array<i64: 256, 128>}]} {
    %c0 = arith.constant 0 : index
    %c0_0 = arith.constant 0 : index
    %0 = vector.load %arg2[%c0, %c0_0] : memref<256x152xbf16, #tpu.memory_space<vmem>>, vector<256x152xbf16>
    %c0_1 = arith.constant 0 : index
    %c0_2 = arith.constant 0 : index
    %1 = vector.load %arg3[%c0_1, %c0_2] : memref<152x128xbf16, #tpu.memory_space<vmem>>, vector<152x128xbf16>
    %cst = arith.constant dense<0.000000e+00> : vector<256x128xf32>
    %2 = tpu.matmul %0, %1, %cst {dimension_numbers = #tpu.dot_dimension_numbers<[1], [0], [0], [1], [0, 0, 1, 1], [], []>} : vector<256x152xbf16>, vector<152x128xbf16>, vector<256x128xf32> -> vector<256x128xf32>
    %c0_3 = arith.constant 0 : index
    %c0_4 = arith.constant 0 : index
    %3 = vector.load %arg4[%c0_3, %c0_4] : memref<1x128xf32, #tpu.memory_space<vmem>>, vector<1x128xf32>
    %4 = vector.broadcast %3 : vector<1x128xf32> to vector<256x128xf32>
    %5 = arith.mulf %2, %4 : vector<256x128xf32>
    %c0_5 = arith.constant 0 : index
    %c0_6 = arith.constant 0 : index
    %6 = vector.load %arg5[%c0_5, %c0_6] : memref<1x128xf32, #tpu.memory_space<vmem>>, vector<1x128xf32>
    %7 = vector.broadcast %6 : vector<1x128xf32> to vector<256x128xf32>
    %8 = arith.addf %5, %7 : vector<256x128xf32>
    %cst_7 = arith.constant 0.000000e+00 : f32
    %9 = vector.broadcast %cst_7 : f32 to vector<256x128xf32>
    %10 = arith.maximumf %8, %9 : vector<256x128xf32>
    %11 = arith.truncf %10 : vector<256x128xf32> to vector<256x128xbf16>
    %c0_8 = arith.constant 0 : index
    %c0_9 = arith.constant 0 : index
    %12 = vector.load %arg6[%c0_8, %c0_9] : memref<256x128xbf16, #tpu.memory_space<vmem>>, vector<256x128xbf16>
    tpu.vector_store %arg6[%c0_8, %c0_9], %11 {strides = array<i32>} : memref<256x128xbf16, #tpu.memory_space<vmem>>, vector<256x128xbf16>,
    return
  }
  func.func @transform_0(%arg0: i32, %arg1: i32) -> (i32, i32) {
    %c0_i32 = arith.constant 0 : i32
    %c0_i32_0 = arith.constant 0 : i32
    return %arg0, %c0_i32 : i32, i32
  }
  func.func @transform_1(%arg0: i32, %arg1: i32) -> (i32, i32) {
    %c0_i32 = arith.constant 0 : i32
    %c0_i32_0 = arith.constant 0 : i32
    return %c0_i32, %arg1 : i32, i32
  }
  func.func @transform_2(%arg0: i32, %arg1: i32) -> (i32, i32) {
    %c0_i32 = arith.constant 0 : i32
    %c0_i32_0 = arith.constant 0 : i32
    return %c0_i32, %arg1 : i32, i32
  }
  func.func @transform_3(%arg0: i32, %arg1: i32) -> (i32, i32) {
    %c0_i32 = arith.constant 0 : i32
    %c0_i32_0 = arith.constant 0 : i32
    return %c0_i32, %arg1 : i32, i32
  }
  func.func @transform_4(%arg0: i32, %arg1: i32) -> (i32, i32) {
    %c0_i32 = arith.constant 0 : i32
    return %arg0, %arg1 : i32, i32
  }
}

</mosaic_0001>

<llo_original>
// kernel: tpu_custom_call.1
$region0: #{tpu_custom_call.1}
  #allocation0 [shape = 'u32[]', space=smem, size = 0x4, offset = 0x4, fixed_abs, tag = 'smem constant byte address 0x4 - core index']
  #allocation1 [shape = 'u32[144,128]{1,0:T(1,128)}', space=vmem, size = 0x12000, scoped, tag = 'internal scratch']
  %s0 = inlined_call_operand.vmem [shape: bf16[512,152], index: 0, kind: input, shape index: {}]
  %s1 = inlined_call_operand.vmem [shape: bf16[152,128], index: 1, kind: input, shape index: {}]
  %s2 = inlined_call_operand.vmem [shape: f32[1,128], index: 2, kind: input, shape index: {}]
  %s3 = inlined_call_operand.vmem [shape: f32[1,128], index: 3, kind: input, shape index: {}]
  %s4 = inlined_call_operand.hbm [shape: bf16[512,128], index: 4, kind: output, shape index: {}]
  %s5 = sld [smem:[#allocation0]]
  $region49: #{tpu_custom_call.1} parent=0
    _
  %s7 = ssub.s32 1, %s5
  %s8 = scalar_select 0, %s7, %s5
  $region1: #{tpu_custom_call.1} parent=0
    #allocation2 [shape = 'u8[131072]{0}', space=vmem, size = 0x20000, scoped, tag = 'output window, operand 0']
    #allocation3 [shape = 's32[2]{0}', space=sflag, size = 0x8, scoped, tag = 'scoped memory for tpu_custom_call.1']
    %9 = vsyncpa [#allocation3], 0
    %s10 = scalar_lea.sflag [#allocation3], 1
    %11 = vsyncpa %s10, 0
    loop: start=0, step=1, limit=4
    $region2: #{tpu_custom_call.1} parent=1 // loop_pre_header
      _
    $region3: #{tpu_custom_call.1} parent=1 // loop_header
      %s13 = sphi 0, %s17
      %p14 = scmp.ge.s32.totalorder %s13, 4
      %s20 = sphi 0, %s32
      %s21 = sphi 0, %s28
      %s22 = sphi 0, %s20
      %s23 = sphi 0, %s21
      %s24 = sphi 0, %s22
      %s25 = sphi 0, %s23
      %s35 = sphi 0, %s37
      %s38 = sphi 0, %s35
      %s39 = sphi 0, %s38
      %s55 = sphi 0, %s39
      %s61 = sphi 0, %s63
      %s64 = sphi 0, %s61
      %s65 = sphi 0, %s64
      %s81 = sphi 0, %s65
      %s87 = sphi 0, %s89
      %s90 = sphi 0, %s87
      %s91 = sphi 0, %s90
      %s107 = sphi 0, %s91
      %s113 = sphi 0, %s115
      %s116 = sphi 0, %s113
      %s117 = sphi 0, %s116
      %s133 = sphi 0, %s117
      %s141 = sphi 0, %s143
      %s144 = sphi 0, %s141
      %s145 = sphi 0, %s144
      %s161 = sphi 0, %s145
    $region4: #{tpu_custom_call.1} parent=1 // loop_header_branch
      %16 = sbr.rel (%p14) target = $region8
    $region5: #{tpu_custom_call.1} parent=1 // loop_body
      %s18 = ssub.s32 %s13, 1
      %s19 = ssub.s32 %s13, 2
      %s26 = sadd.s32 1, %s21
      %p27 = scmp.ge.s32.totalorder %s26, 1
      %s28 = scalar_select %p27, 0, %s26
      %s29 = sadd.s32 1, %s20
      %s30 = scalar_select %p27, %s29, %s20
      %p31 = scmp.ge.s32.totalorder %s30, 2
      %s32 = scalar_select %p31, 0, %s30
      %s33 = ssub.s32 %s20, %s32
      %p34 = scmp.eq.s32.totalorder %s33, 0
      %s36 = sadd.s32 %s35, 1
      %s37 = scalar_select %p34, %s35, %s36
      %p40 = pneg %p34
      %p41 = scmp.eq.s32.totalorder %s13, 1
      %p42 = por %p40, %p41
      %p43 = scmp.ne.s32.totalorder %s35, %s38
      %p44 = scmp.eq.s32.totalorder %s13, 0
      %p45 = por %p43, %p44
      %p46 = scmp.ne.s32.totalorder %s35, %s38
      %p47 = scmp.eq.s32.totalorder %s18, 1
      %p48 = por %p46, %p47
      %p49 = scmp.ne.s32.totalorder %s38, %s39
      %p50 = scmp.eq.s32.totalorder %s18, 0
      %p51 = por %p49, %p50
      %p52 = scmp.ne.s32.totalorder %s38, %s39
      %p53 = scmp.eq.s32.totalorder %s19, 1
      %p54 = por %p52, %p53
      %p56 = scmp.ne.s32.totalorder %s39, %s55
      %p57 = scmp.eq.s32.totalorder %s19, 0
      %p58 = por %p56, %p57
      %s59 = ssub.s32 %s21, %s28
      %p60 = scmp.eq.s32.totalorder %s59, 0
      %s62 = sadd.s32 %s61, 1
      %s63 = scalar_select %p60, %s61, %s62
      %p66 = pneg %p60
      %p67 = scmp.eq.s32.totalorder %s13, 1
      %p68 = por %p66, %p67
      %p69 = scmp.ne.s32.totalorder %s61, %s64
      %p70 = scmp.eq.s32.totalorder %s13, 0
      %p71 = por %p69, %p70
      %p72 = scmp.ne.s32.totalorder %s61, %s64
      %p73 = scmp.eq.s32.totalorder %s18, 1
      %p74 = por %p72, %p73
      %p75 = scmp.ne.s32.totalorder %s64, %s65
      %p76 = scmp.eq.s32.totalorder %s18, 0
      %p77 = por %p75, %p76
      %p78 = scmp.ne.s32.totalorder %s64, %s65
      %p79 = scmp.eq.s32.totalorder %s19, 1
      %p80 = por %p78, %p79
      %p82 = scmp.ne.s32.totalorder %s65, %s81
      %p83 = scmp.eq.s32.totalorder %s19, 0
      %p84 = por %p82, %p83
      %s85 = ssub.s32 %s21, %s28
      %p86 = scmp.eq.s32.totalorder %s85, 0
      %s88 = sadd.s32 %s87, 1
      %s89 = scalar_select %p86, %s87, %s88
      %p92 = pneg %p86
      %p93 = scmp.eq.s32.totalorder %s13, 1
      %p94 = por %p92, %p93
      %p95 = scmp.ne.s32.totalorder %s87, %s90
      %p96 = scmp.eq.s32.totalorder %s13, 0
      %p97 = por %p95, %p96
      %p98 = scmp.ne.s32.totalorder %s87, %s90
      %p99 = scmp.eq.s32.totalorder %s18, 1
      %p100 = por %p98, %p99
      %p101 = scmp.ne.s32.totalorder %s90, %s91
      %p102 = scmp.eq.s32.totalorder %s18, 0
      %p103 = por %p101, %p102
      %p104 = scmp.ne.s32.totalorder %s90, %s91
      %p105 = scmp.eq.s32.totalorder %s19, 1
      %p106 = por %p104, %p105
      %p108 = scmp.ne.s32.totalorder %s91, %s107
      %p109 = scmp.eq.s32.totalorder %s19, 0
      %p110 = por %p108, %p109
      %s111 = ssub.s32 %s21, %s28
      %p112 = scmp.eq.s32.totalorder %s111, 0
      %s114 = sadd.s32 %s113, 1
      %s115 = scalar_select %p112, %s113, %s114
      %p118 = pneg %p112
      %p119 = scmp.eq.s32.totalorder %s13, 1
      %p120 = por %p118, %p119
      %p121 = scmp.ne.s32.totalorder %s113, %s116
      %p122 = scmp.eq.s32.totalorder %s13, 0
      %p123 = por %p121, %p122
      %p124 = scmp.ne.s32.totalorder %s113, %s116
      %p125 = scmp.eq.s32.totalorder %s18, 1
      %p126 = por %p124, %p125
      %p127 = scmp.ne.s32.totalorder %s116, %s117
      %p128 = scmp.eq.s32.totalorder %s18, 0
      %p129 = por %p127, %p128
      %p130 = scmp.ne.s32.totalorder %s116, %s117
      %p131 = scmp.eq.s32.totalorder %s19, 1
      %p132 = por %p130, %p131
      %p134 = scmp.ne.s32.totalorder %s117, %s133
      %p135 = scmp.eq.s32.totalorder %s19, 0
      %p136 = por %p134, %p135
      %s137 = ssub.s32 %s20, %s32
      %s138 = ssub.s32 %s21, %s28
      %s139 = sor.u32 %s137, %s138
      %p140 = scmp.eq.s32.totalorder %s139, 0
      %s142 = sadd.s32 %s141, 1
      %s143 = scalar_select %p140, %s141, %s142
      %p146 = pneg %p140
      %p147 = scmp.eq.s32.totalorder %s13, 1
      %p148 = por %p146, %p147
      %p149 = scmp.ne.s32.totalorder %s141, %s144
      %p150 = scmp.eq.s32.totalorder %s13, 0
      %p151 = por %p149, %p150
      %p152 = scmp.ne.s32.totalorder %s141, %s144
      %p153 = scmp.eq.s32.totalorder %s18, 1
      %p154 = por %p152, %p153
      %p155 = scmp.ne.s32.totalorder %s144, %s145
      %p156 = scmp.eq.s32.totalorder %s18, 0
      %p157 = por %p155, %p156
      %p158 = scmp.ne.s32.totalorder %s144, %s145
      %p159 = scmp.eq.s32.totalorder %s19, 1
      %p160 = por %p158, %p159
      %p162 = scmp.ne.s32.totalorder %s145, %s161
      %p163 = scmp.eq.s32.totalorder %s19, 0
      %p164 = por %p162, %p163
      %p165 = scmp.le.s32.totalorder 1, %s13
      %p166 = scmp.lt.s32.totalorder %s13, 3
      %p167 = pnand %p165, %p166
      %p168 = pneg %p167
      // Predicated region
      $region9: #{tpu_custom_call.1} parent=5 // pred_check
        _
      $region10: #{tpu_custom_call.1} parent=5 // pred_check_branch
        %170 = sbr.rel (%p167) target = $region12
      $region11: #{tpu_custom_call.1} parent=5 // pred_region
        %s171 = ssub.s32 %s13, 1
        // Predicated region
        $region13: #{tpu_custom_call.1} parent=11 // pred_check
          %p172 = pneg %p77
        $region14: #{tpu_custom_call.1} parent=11 // pred_check_branch
          %174 = sbr.rel (%p172) target = $region16
        $region15: #{tpu_custom_call.1} parent=11 // pred_region
          %p175 = scmp.lt.s32.totalorder %s23, 0
          %s176 = scalar_select %p175, %s23, 0
          %s177 = smul.addr %s176, 4
          %s178 = scalar_lea.vmem %s1, %s177
        $region16: #{tpu_custom_call.1} parent=11 // pred_fallthru
          _
        // Predicated region
        $region17: #{tpu_custom_call.1} parent=11 // pred_check
          %p179 = pneg %p103
        $region18: #{tpu_custom_call.1} parent=11 // pred_check_branch
          %181 = sbr.rel (%p179) target = $region20
        $region19: #{tpu_custom_call.1} parent=11 // pred_region
          %p182 = scmp.lt.s32.totalorder %s23, 0
          %s183 = scalar_select %p182, %s23, 0
          %s184 = scalar_lea.vmem %s2, %s183
        $region20: #{tpu_custom_call.1} parent=11 // pred_fallthru
          _
        // Predicated region
        $region21: #{tpu_custom_call.1} parent=11 // pred_check
          %p185 = pneg %p129
        $region22: #{tpu_custom_call.1} parent=11 // pred_check_branch
          %187 = sbr.rel (%p185) target = $region24
        $region23: #{tpu_custom_call.1} parent=11 // pred_region
          %p188 = scmp.lt.s32.totalorder %s23, 0
          %s189 = scalar_select %p188, %s23, 0
          %s190 = scalar_lea.vmem %s3, %s189
        $region24: #{tpu_custom_call.1} parent=11 // pred_fallthru
          _
      $region12: #{tpu_custom_call.1} parent=5 // pred_fallthru
        _
      %p191 = scmp.lt.s32.totalorder %s13, 2
      // Predicated region
      $region25: #{tpu_custom_call.1} parent=5 // pred_check
        %p192 = pneg %p191
      $region26: #{tpu_custom_call.1} parent=5 // pred_check_branch
        %194 = sbr.rel (%p192) target = $region28
      $region27: #{tpu_custom_call.1} parent=5 // pred_region
        // Predicated region
        $region29: #{tpu_custom_call.1} parent=27 // pred_check
          %p195 = pneg %p45
        $region30: #{tpu_custom_call.1} parent=27 // pred_check_branch
          %197 = sbr.rel (%p195) target = $region32
        $region31: #{tpu_custom_call.1} parent=27 // pred_region
          %s198 = smul.u32 32, %s20
          %p199 = scmp.lt.s32.totalorder %s198, 63
          %s200 = scalar_select %p199, %s198, 63
          %s201 = smul.addr %s200, 2
          %s202 = smul.addr %s201, 4
          %s203 = scalar_lea.vmem %s0, %s202
          %s204 = smul.u32 32, %s20
        $region32: #{tpu_custom_call.1} parent=27 // pred_fallthru
          _
      $region28: #{tpu_custom_call.1} parent=5 // pred_fallthru
        _
      %p205 = scmp.le.s32.totalorder 1, %s13
      %p206 = scmp.lt.s32.totalorder %s13, 3
      %p207 = pnand %p205, %p206
      %p208 = pneg %p207
      // Predicated region
      $region33: #{tpu_custom_call.1} parent=5 // pred_check
        _
      $region34: #{tpu_custom_call.1} parent=5 // pred_check_branch
        %210 = sbr.rel (%p207) target = $region36
      $region35: #{tpu_custom_call.1} parent=5 // pred_region
        %s211 = ssub.s32 %s13, 1
        %s212 = smul.u32 32, %s22
        %p213 = scmp.lt.s32.totalorder %s212, 63
        %s214 = scalar_select %p213, %s212, 63
        %s215 = smul.addr %s214, 2
        %s216 = smul.addr %s215, 4
        %s217 = scalar_lea.vmem %s0, %s216
        %p218 = pneg %p51
        %p219 = pneg %p48
        %p220 = scmp.lt.s32.totalorder %s23, 0
        %s221 = scalar_select %p220, %s23, 0
        %s222 = smul.addr %s221, 4
        %s223 = scalar_lea.vmem %s1, %s222
        %p224 = pneg %p77
        %p225 = pneg %p74
        %p226 = scmp.lt.s32.totalorder %s23, 0
        %s227 = scalar_select %p226, %s23, 0
        %s228 = scalar_lea.vmem %s2, %s227
        %p229 = pneg %p103
        %p230 = pneg %p100
        %p231 = scmp.lt.s32.totalorder %s23, 0
        %s232 = scalar_select %p231, %s23, 0
        %s233 = scalar_lea.vmem %s3, %s232
        %p234 = pneg %p129
        %p235 = pneg %p126
        %p236 = pneg %p157
        %p237 = pneg %p154
        %s238 = sand.u32 %s144, 1
        %s239 = scalar_lea.sflag [#allocation3], %s238
        %s240 = sand.u32 %s144, 1
        %s241 = smul.addr %s240, 128
        %s242 = scalar_lea.vmem [#allocation2], %s241
        %s243 = smul.u32 32, %s22
        %p244 = scmp.lt.s32.totalorder %s243, 63
        %s245 = scalar_select %p244, %s243, 63
        %s246 = smul.addr %s245, 2
        %s247 = smul.addr %s246, 4
        %s248 = scalar_lea.vmem %s0, %s247
        %s249 = smul.u32 32, %s22
        %p250 = scmp.lt.s32.totalorder %s23, 0
        %s251 = scalar_select %p250, %s23, 0
        %s252 = smul.addr %s251, 4
        %s253 = scalar_lea.vmem %s1, %s252
        %p254 = scmp.lt.s32.totalorder %s23, 0
        %s255 = scalar_select %p254, %s23, 0
        %s256 = scalar_lea.vmem %s2, %s255
        %p257 = scmp.lt.s32.totalorder %s23, 0
        %s258 = scalar_select %p257, %s23, 0
        %s259 = scalar_lea.vmem %s3, %s258
        %s260 = smul.u32 32, %s22
        %v262 = vld [vmem:[%s248] sm:$0xff]
        %v263 = vld [vmem:[%s248 + $0x8] sm:$0xff]
        %v264 = vld [vmem:[%s248 + $0x10] sm:$0xff]
        %v265 = vld [vmem:[%s248 + $0x18] sm:$0xff]
        %v266 = vld [vmem:[%s248 + $0x20] sm:$0xff]
        %v267 = vld [vmem:[%s248 + $0x28] sm:$0xff]
        %v268 = vld [vmem:[%s248 + $0x30] sm:$0xff]
        %v269 = vld [vmem:[%s248 + $0x38] sm:$0xff]
        %v270 = vld [vmem:[%s248 + $0x40] sm:$0xff]
        %v271 = vld [vmem:[%s248 + $0x48] sm:$0xff]
        %v272 = vld [vmem:[%s248 + $0x50] sm:$0xff]
        %v273 = vld [vmem:[%s248 + $0x58] sm:$0xff]
        %v274 = vld [vmem:[%s248 + $0x60] sm:$0xff]
        %v275 = vld [vmem:[%s248 + $0x68] sm:$0xff]
        %v276 = vld [vmem:[%s248 + $0x70] sm:$0xff]
        %v277 = vld [vmem:[%s248 + $0x78] sm:$0xff]
        %v278 = vld [vmem:[%s248 + $0x80] sm:$0xff]
        %v279 = vld [vmem:[%s248 + $0x88] sm:$0xff]
        %v280 = vld [vmem:[%s248 + $0x90] sm:$0xff]
        %v281 = vld [vmem:[%s248 + $0x98] sm:$0xff]
        %v282 = vld [vmem:[%s248 + $0xa0] sm:$0xff]
        %v283 = vld [vmem:[%s248 + $0xa8] sm:$0xff]
        %v284 = vld [vmem:[%s248 + $0xb0] sm:$0xff]
        %v285 = vld [vmem:[%s248 + $0xb8] sm:$0xff]
        %v286 = vld [vmem:[%s248 + $0xc0] sm:$0xff]
        %v287 = vld [vmem:[%s248 + $0xc8] sm:$0xff]
        %v288 = vld [vmem:[%s248 + $0xd0] sm:$0xff]
        %v289 = vld [vmem:[%s248 + $0xd8] sm:$0xff]
        %v290 = vld [vmem:[%s248 + $0xe0] sm:$0xff]
        %v291 = vld [vmem:[%s248 + $0xe8] sm:$0xff]
        %v292 = vld [vmem:[%s248 + $0xf0] sm:$0xff]
        %v293 = vld [vmem:[%s248 + $0xf8] sm:$0xff]
        %v294 = vld [vmem:[%s253] sm:$0xf]
        %v295 = vld [vmem:[%s253 + $0x4] sm:$0xf]
        %v296 = vld [vmem:[%s253 + $0x8] sm:$0xf]
        %v297 = vld [vmem:[%s253 + $0xc] sm:$0xf]
        %v298 = vld [vmem:[%s253 + $0x10] sm:$0xf]
        %v299 = vld [vmem:[%s253 + $0x14] sm:$0xf]
        %v300 = vld [vmem:[%s253 + $0x18] sm:$0xf]
        %v301 = vld [vmem:[%s253 + $0x1c] sm:$0xf]
        %v302 = vld [vmem:[%s253 + $0x20] sm:$0xf]
        %v303 = vld [vmem:[%s253 + $0x24] sm:$0xf]
        %v304 = vld [vmem:[%s253 + $0x28] sm:$0xf]
        %v305 = vld [vmem:[%s253 + $0x2c] sm:$0xf]
        %v306 = vld [vmem:[%s253 + $0x30] sm:$0xf]
        %v307 = vld [vmem:[%s253 + $0x34] sm:$0xf]
        %v308 = vld [vmem:[%s253 + $0x38] sm:$0xf]
        %v309 = vld [vmem:[%s253 + $0x3c] sm:$0xf]
        %v310 = vld [vmem:[%s253 + $0x40] sm:$0xf]
        %v311 = vld [vmem:[%s253 + $0x44] sm:$0xf]
        %v312 = vld [vmem:[%s253 + $0x48] sm:$0xf]
        %v345 = vunpack.c.l.b16 %v262
        %v346 = vunpack.c.h.b16 %v262
        %v347 = vunpack.c.l.b16 %v263
        %v348 = vunpack.c.h.b16 %v263
        %v349 = vunpack.c.l.b16 %v264
        %v350 = vunpack.c.h.b16 %v264
        %v351 = vunpack.c.l.b16 %v265
        %v352 = vunpack.c.h.b16 %v265
        %v353 = vunpack.c.l.b16 %v266
        %v354 = vunpack.c.h.b16 %v266
        %v355 = vunpack.c.l.b16 %v267
        %v356 = vunpack.c.h.b16 %v267
        %v357 = vunpack.c.l.b16 %v268
        %v358 = vunpack.c.h.b16 %v268
        %v359 = vunpack.c.l.b16 %v269
        %v360 = vunpack.c.h.b16 %v269
        %v361 = vunpack.c.l.b16 %v270
        %v362 = vunpack.c.h.b16 %v270
        %v363 = vunpack.c.l.b16 %v271
        %v364 = vunpack.c.h.b16 %v271
        %v365 = vunpack.c.l.b16 %v272
        %v366 = vunpack.c.h.b16 %v272
        %v367 = vunpack.c.l.b16 %v273
        %v368 = vunpack.c.h.b16 %v273
        %v369 = vunpack.c.l.b16 %v274
        %v370 = vunpack.c.h.b16 %v274
        %v371 = vunpack.c.l.b16 %v275
        %v372 = vunpack.c.h.b16 %v275
        %v373 = vunpack.c.l.b16 %v276
        %v374 = vunpack.c.h.b16 %v276
        %v375 = vunpack.c.l.b16 %v277
        %v376 = vunpack.c.h.b16 %v277
        %v377 = vunpack.c.l.b16 %v278
        %v378 = vunpack.c.h.b16 %v278
        %v379 = vunpack.c.l.b16 %v279
        %v380 = vunpack.c.h.b16 %v279
        %v381 = vunpack.c.l.b16 %v280
        %v382 = vunpack.c.h.b16 %v280
        %v383 = vunpack.c.l.b16 %v281
        %v384 = vunpack.c.h.b16 %v281
        %v385 = vunpack.c.l.b16 %v282
        %v386 = vunpack.c.h.b16 %v282
        %v387 = vunpack.c.l.b16 %v283
        %v388 = vunpack.c.h.b16 %v283
        %v389 = vunpack.c.l.b16 %v284
        %v390 = vunpack.c.h.b16 %v284
        %v391 = vunpack.c.l.b16 %v285
        %v392 = vunpack.c.h.b16 %v285
        %v393 = vunpack.c.l.b16 %v286
        %v394 = vunpack.c.h.b16 %v286
        %v395 = vunpack.c.l.b16 %v287
        %v396 = vunpack.c.h.b16 %v287
        %v397 = vunpack.c.l.b16 %v288
        %v398 = vunpack.c.h.b16 %v288
        %v399 = vunpack.c.l.b16 %v289
        %v400 = vunpack.c.h.b16 %v289
        %v401 = vunpack.c.l.b16 %v290
        %v402 = vunpack.c.h.b16 %v290
        %v403 = vunpack.c.l.b16 %v291
        %v404 = vunpack.c.h.b16 %v291
        %v405 = vunpack.c.l.b16 %v292
        %v406 = vunpack.c.h.b16 %v292
        %v407 = vunpack.c.l.b16 %v293
        %v408 = vunpack.c.h.b16 %v293
        %v409 = vpack.c.b16 %v347, %v345
        %v410 = vpack.c.b16 %v348, %v346
        %v411 = vpack.c.b16 %v351, %v349
        %v412 = vpack.c.b16 %v352, %v350
        %v413 = vpack.c.b16 %v355, %v353
        %v414 = vpack.c.b16 %v356, %v354
        %v415 = vpack.c.b16 %v359, %v357
        %v416 = vpack.c.b16 %v360, %v358
        %v417 = vpack.c.b16 %v363, %v361
        %v418 = vpack.c.b16 %v364, %v362
        %v419 = vpack.c.b16 %v367, %v365
        %v420 = vpack.c.b16 %v368, %v366
        %v421 = vpack.c.b16 %v371, %v369
        %v422 = vpack.c.b16 %v372, %v370
        %v423 = vpack.c.b16 %v375, %v373
        %v424 = vpack.c.b16 %v376, %v374
        %v425 = vpack.c.b16 %v379, %v377
        %v426 = vpack.c.b16 %v380, %v378
        %v427 = vpack.c.b16 %v383, %v381
        %v428 = vpack.c.b16 %v384, %v382
        %v429 = vpack.c.b16 %v387, %v385
        %v430 = vpack.c.b16 %v388, %v386
        %v431 = vpack.c.b16 %v391, %v389
        %v432 = vpack.c.b16 %v392, %v390
        %v433 = vpack.c.b16 %v395, %v393
        %v434 = vpack.c.b16 %v396, %v394
        %v435 = vpack.c.b16 %v399, %v397
        %v436 = vpack.c.b16 %v400, %v398
        %v437 = vpack.c.b16 %v403, %v401
        %v438 = vpack.c.b16 %v404, %v402
        %v439 = vpack.c.b16 %v407, %v405
        %v440 = vpack.c.b16 %v408, %v406
        %v476 = vunpack.c.l.b16 %v294
        %v477 = vunpack.c.l.b16 %v295
        %v478 = vunpack.c.l.b16 %v296
        %v479 = vunpack.c.l.b16 %v297
        %v480 = vunpack.c.l.b16 %v298
        %v481 = vunpack.c.l.b16 %v299
        %v482 = vunpack.c.l.b16 %v300
        %v483 = vunpack.c.l.b16 %v301
        %v484 = vunpack.c.l.b16 %v302
        %v485 = vunpack.c.l.b16 %v303
        %v486 = vunpack.c.l.b16 %v304
        %v487 = vunpack.c.l.b16 %v305
        %v488 = vunpack.c.l.b16 %v306
        %v489 = vunpack.c.l.b16 %v307
        %v490 = vunpack.c.l.b16 %v308
        %v491 = vunpack.c.l.b16 %v309
        %v492 = vunpack.c.l.b16 %v310
        %v493 = vunpack.c.l.b16 %v311
        %v494 = vunpack.c.l.b16 %v312
        %v495 = vpack.c.b16 %v477, %v476
        %v496 = vpack.c.b16 %v479, %v478
        %v497 = vpack.c.b16 %v481, %v480
        %v498 = vpack.c.b16 %v483, %v482
        %v499 = vpack.c.b16 %v485, %v484
        %v500 = vpack.c.b16 %v487, %v486
        %v501 = vpack.c.b16 %v489, %v488
        %v502 = vpack.c.b16 %v491, %v490
        %v503 = vpack.c.b16 %v493, %v492
        %v504 = vpack.c.b16 %v494, %v494
        %vm514 = vcmask 195584
        %v516 = vsel %vm514, %v410, 0
        %v519 = vsel %vm514, %v412, 0
        %v522 = vsel %vm514, %v414, 0
        %v525 = vsel %vm514, %v416, 0
        %v528 = vsel %vm514, %v418, 0
        %v531 = vsel %vm514, %v420, 0
        %v534 = vsel %vm514, %v422, 0
        %v537 = vsel %vm514, %v424, 0
        %v540 = vsel %vm514, %v426, 0
        %v543 = vsel %vm514, %v428, 0
        %v546 = vsel %vm514, %v430, 0
        %v549 = vsel %vm514, %v432, 0
        %v552 = vsel %vm514, %v434, 0
        %v555 = vsel %vm514, %v436, 0
        %v558 = vsel %vm514, %v438, 0
        %v561 = vsel %vm514, %v440, 0
        %vm563 = vcmask 1043456
        %v565 = vsel %vm563, %v504, 0
        %567 = vmatprep.subr.bf16.mxu0 0
        %568 = vmatpush1.bf16.msra.mxu0 %v495
        %569 = vmatprep.subr.bf16.mxu0 0
        %570 = vmatpush1.bf16.msra.mxu0 %v496
        %571 = vmatprep.subr.bf16.mxu0 0
        %572 = vmatpush1.bf16.msra.mxu0 %v497
        %573 = vmatprep.subr.bf16.mxu0 0
        %574 = vmatpush1.bf16.msra.mxu0 %v498
        %575 = vmatprep.subr.bf16.mxu0 0
        %576 = vmatpush1.bf16.msra.mxu0 %v499
        %577 = vmatprep.subr.bf16.mxu0 0
        %578 = vmatpush1.bf16.msra.mxu0 %v500
        %579 = vmatprep.subr.bf16.mxu0 0
        %580 = vmatpush1.bf16.msra.mxu0 %v501
        %581 = vmatprep.subr.bf16.mxu0 0
        %582 = vmatpush1.bf16.msra.mxu0 %v502
        %583 = vmatprep.subr.bf16.mxu0 0
        %584 = vmatpush1.bf16.msra.mxu0 %v503
        %585 = vmatprep.subr.bf16.mxu0 0
        %586 = vmatpush1.bf16.msra.mxu0 %v565
        %587 = vmatprep.subr.bf16.mxu0 0
        %588 = vmatpush1.bf16.msra.mxu0 0
        %589 = vmatprep.subr.bf16.mxu0 0
        %590 = vmatpush1.bf16.msra.mxu0 0
        %591 = vmatprep.subr.bf16.mxu0 0
        %592 = vmatpush1.bf16.msra.mxu0 0
        %593 = vmatprep.subr.bf16.mxu0 0
        %594 = vmatpush1.bf16.msra.mxu0 0
        %595 = vmatprep.subr.bf16.mxu0 0
        %596 = vmatpush1.bf16.msra.mxu0 0
        %597 = vmatprep.subr.bf16.mxu0 0
        %598 = vmatpush1.bf16.msra.mxu0 0
        %599 = vmatprep.mubr.bf16.mxu0 %v516
        %600 = vmatmul.mubr.bf16.gmra.mrb[0].mxu0 %v409
        %v601 = vpop.f32.mrb[0].mxu0
        %v602 = vadd.f32 0.0, %v601
        %v603 = vpop.f32.mrb[0].mxu0
        %v604 = vpop.f32.mrb[0].mxu0
        %v605 = vadd.f32 0.0, %v604
        %v606 = vpop.f32.mrb[0].mxu0
        %607 = vmatprep.mubr.bf16.mxu0 %v519
        %608 = vmatmul.mubr.bf16.gmra.mrb[0].mxu0 %v411
        %v609 = vpop.f32.mrb[0].mxu0
        %v610 = vadd.f32 0.0, %v609
        %v611 = vpop.f32.mrb[0].mxu0
        %v612 = vpop.f32.mrb[0].mxu0
        %v613 = vadd.f32 0.0, %v612
        %v614 = vpop.f32.mrb[0].mxu0
        %615 = vmatprep.mubr.bf16.mxu0 %v522
        %616 = vmatmul.mubr.bf16.gmra.mrb[0].mxu0 %v413
        %v617 = vpop.f32.mrb[0].mxu0
        %v618 = vadd.f32 0.0, %v617
        %v619 = vpop.f32.mrb[0].mxu0
        %v620 = vpop.f32.mrb[0].mxu0
        %v621 = vadd.f32 0.0, %v620
        %v622 = vpop.f32.mrb[0].mxu0
        %623 = vmatprep.mubr.bf16.mxu0 %v525
        %624 = vmatmul.mubr.bf16.gmra.mrb[0].mxu0 %v415
        %v625 = vpop.f32.mrb[0].mxu0
        %v626 = vadd.f32 0.0, %v625
        %v627 = vpop.f32.mrb[0].mxu0
        %v628 = vpop.f32.mrb[0].mxu0
        %v629 = vadd.f32 0.0, %v628
        %v630 = vpop.f32.mrb[0].mxu0
        %631 = vmatprep.mubr.bf16.mxu0 %v528
        %632 = vmatmul.mubr.bf16.gmra.mrb[0].mxu0 %v417
        %v633 = vpop.f32.mrb[0].mxu0
        %v634 = vadd.f32 0.0, %v633
        %v635 = vpop.f32.mrb[0].mxu0
        %v636 = vpop.f32.mrb[0].mxu0
        %v637 = vadd.f32 0.0, %v636
        %v638 = vpop.f32.mrb[0].mxu0
        %639 = vmatprep.mubr.bf16.mxu0 %v531
        %640 = vmatmul.mubr.bf16.gmra.mrb[0].mxu0 %v419
        %v641 = vpop.f32.mrb[0].mxu0
        %v642 = vadd.f32 0.0, %v641
        %v643 = vpop.f32.mrb[0].mxu0
        %v644 = vpop.f32.mrb[0].mxu0
        %v645 = vadd.f32 0.0, %v644
        %v646 = vpop.f32.mrb[0].mxu0
        %647 = vmatprep.mubr.bf16.mxu0 %v534
        %648 = vmatmul.mubr.bf16.gmra.mrb[0].mxu0 %v421
        %v649 = vpop.f32.mrb[0].mxu0
        %v650 = vadd.f32 0.0, %v649
        %v651 = vpop.f32.mrb[0].mxu0
        %v652 = vpop.f32.mrb[0].mxu0
        %v653 = vadd.f32 0.0, %v652
        %v654 = vpop.f32.mrb[0].mxu0
        %655 = vmatprep.mubr.bf16.mxu0 %v537
        %656 = vmatmul.mubr.bf16.gmra.mrb[0].mxu0 %v423
        %v657 = vpop.f32.mrb[0].mxu0
        %v658 = vadd.f32 0.0, %v657
        %v659 = vpop.f32.mrb[0].mxu0
        %v660 = vpop.f32.mrb[0].mxu0
        %v661 = vadd.f32 0.0, %v660
        %v662 = vpop.f32.mrb[0].mxu0
        %663 = vmatprep.mubr.bf16.mxu0 %v540
        %664 = vmatmul.mubr.bf16.gmra.mrb[0].mxu0 %v425
        %v665 = vpop.f32.mrb[0].mxu0
        %v666 = vadd.f32 0.0, %v665
        %v667 = vpop.f32.mrb[0].mxu0
        %v668 = vpop.f32.mrb[0].mxu0
        %v669 = vadd.f32 0.0, %v668
        %v670 = vpop.f32.mrb[0].mxu0
        %671 = vmatprep.mubr.bf16.mxu0 %v543
        %672 = vmatmul.mubr.bf16.gmra.mrb[0].mxu0 %v427
        %v673 = vpop.f32.mrb[0].mxu0
        %v674 = vadd.f32 0.0, %v673
        %v675 = vpop.f32.mrb[0].mxu0
        %v676 = vpop.f32.mrb[0].mxu0
        %v677 = vadd.f32 0.0, %v676
        %v678 = vpop.f32.mrb[0].mxu0
        %679 = vmatprep.mubr.bf16.mxu0 %v546
        %680 = vmatmul.mubr.bf16.gmra.mrb[0].mxu0 %v429
        %v681 = vpop.f32.mrb[0].mxu0
        %v682 = vadd.f32 0.0, %v681
        %v683 = vpop.f32.mrb[0].mxu0
        %v684 = vpop.f32.mrb[0].mxu0
        %v685 = vadd.f32 0.0, %v684
        %v686 = vpop.f32.mrb[0].mxu0
        %687 = vmatprep.mubr.bf16.mxu0 %v549
        %688 = vmatmul.mubr.bf16.gmra.mrb[0].mxu0 %v431
        %v689 = vpop.f32.mrb[0].mxu0
        %v690 = vadd.f32 0.0, %v689
        %v691 = vpop.f32.mrb[0].mxu0
        %v692 = vpop.f32.mrb[0].mxu0
        %v693 = vadd.f32 0.0, %v692
        %v694 = vpop.f32.mrb[0].mxu0
        %695 = vmatprep.mubr.bf16.mxu0 %v552
        %696 = vmatmul.mubr.bf16.gmra.mrb[0].mxu0 %v433
        %v697 = vpop.f32.mrb[0].mxu0
        %v698 = vadd.f32 0.0, %v697
        %v699 = vpop.f32.mrb[0].mxu0
        %v700 = vpop.f32.mrb[0].mxu0
        %v701 = vadd.f32 0.0, %v700
        %v702 = vpop.f32.mrb[0].mxu0
        %703 = vmatprep.mubr.bf16.mxu0 %v555
        %704 = vmatmul.mubr.bf16.gmra.mrb[0].mxu0 %v435
        %v705 = vpop.f32.mrb[0].mxu0
        %v706 = vadd.f32 0.0, %v705
        %v707 = vpop.f32.mrb[0].mxu0
        %v708 = vpop.f32.mrb[0].mxu0
        %v709 = vadd.f32 0.0, %v708
        %v710 = vpop.f32.mrb[0].mxu0
        %711 = vmatprep.mubr.bf16.mxu0 %v558
        %712 = vmatmul.mubr.bf16.gmra.mrb[0].mxu0 %v437
        %v713 = vpop.f32.mrb[0].mxu0
        %v714 = vadd.f32 0.0, %v713
        %v715 = vpop.f32.mrb[0].mxu0
        %v716 = vpop.f32.mrb[0].mxu0
        %v717 = vadd.f32 0.0, %v716
        %v718 = vpop.f32.mrb[0].mxu0
        %719 = vmatprep.mubr.bf16.mxu0 %v561
        %720 = vmatmul.mubr.bf16.gmra.mrb[0].mxu0 %v439
        %v721 = vpop.f32.mrb[0].mxu0
        %v722 = vadd.f32 0.0, %v721
        %v723 = vpop.f32.mrb[0].mxu0
        %v724 = vpop.f32.mrb[0].mxu0
        %v725 = vadd.f32 0.0, %v724
        %v726 = vpop.f32.mrb[0].mxu0
        %727 = vdwg.mxu0
        %v728 = vld [vmem:[%s256] sm:$0x1]
        %v730 = vlaneseq
        %v731 = vshrl.u32 %v730, 7
        %v732 = vsub.s32 0, %v731
        %v733 = vrot.slane %v728, %v732
        %v735 = vmul.f32 %v602, %v733
        %v736 = vmul.f32 %v605, %v733
        %v737 = vmul.f32 %v610, %v733
        %v738 = vmul.f32 %v613, %v733
        %v739 = vmul.f32 %v618, %v733
        %v740 = vmul.f32 %v621, %v733
        %v741 = vmul.f32 %v626, %v733
        %v742 = vmul.f32 %v629, %v733
        %v743 = vmul.f32 %v634, %v733
        %v744 = vmul.f32 %v637, %v733
        %v745 = vmul.f32 %v642, %v733
        %v746 = vmul.f32 %v645, %v733
        %v747 = vmul.f32 %v650, %v733
        %v748 = vmul.f32 %v653, %v733
        %v749 = vmul.f32 %v658, %v733
        %v750 = vmul.f32 %v661, %v733
        %v751 = vmul.f32 %v666, %v733
        %v752 = vmul.f32 %v669, %v733
        %v753 = vmul.f32 %v674, %v733
        %v754 = vmul.f32 %v677, %v733
        %v755 = vmul.f32 %v682, %v733
        %v756 = vmul.f32 %v685, %v733
        %v757 = vmul.f32 %v690, %v733
        %v758 = vmul.f32 %v693, %v733
        %v759 = vmul.f32 %v698, %v733
        %v760 = vmul.f32 %v701, %v733
        %v761 = vmul.f32 %v706, %v733
        %v762 = vmul.f32 %v709, %v733
        %v763 = vmul.f32 %v714, %v733
        %v764 = vmul.f32 %v717, %v733
        %v765 = vmul.f32 %v722, %v733
        %v766 = vmul.f32 %v725, %v733
        %v767 = vld [vmem:[%s259] sm:$0x1]
        %v769 = vlaneseq
        %v770 = vshrl.u32 %v769, 7
        %v771 = vsub.s32 0, %v770
        %v772 = vrot.slane %v767, %v771
        %v774 = vadd.f32 %v735, %v772
        %v775 = vadd.f32 %v736, %v772
        %v776 = vadd.f32 %v737, %v772
        %v777 = vadd.f32 %v738, %v772
        %v778 = vadd.f32 %v739, %v772
        %v779 = vadd.f32 %v740, %v772
        %v780 = vadd.f32 %v741, %v772
        %v781 = vadd.f32 %v742, %v772
        %v782 = vadd.f32 %v743, %v772
        %v783 = vadd.f32 %v744, %v772
        %v784 = vadd.f32 %v745, %v772
        %v785 = vadd.f32 %v746, %v772
        %v786 = vadd.f32 %v747, %v772
        %v787 = vadd.f32 %v748, %v772
        %v788 = vadd.f32 %v749, %v772
        %v789 = vadd.f32 %v750, %v772
        %v790 = vadd.f32 %v751, %v772
        %v791 = vadd.f32 %v752, %v772
        %v792 = vadd.f32 %v753, %v772
        %v793 = vadd.f32 %v754, %v772
        %v794 = vadd.f32 %v755, %v772
        %v795 = vadd.f32 %v756, %v772
        %v796 = vadd.f32 %v757, %v772
        %v797 = vadd.f32 %v758, %v772
        %v798 = vadd.f32 %v759, %v772
        %v799 = vadd.f32 %v760, %v772
        %v800 = vadd.f32 %v761, %v772
        %v801 = vadd.f32 %v762, %v772
        %v802 = vadd.f32 %v763, %v772
        %v803 = vadd.f32 %v764, %v772
        %v804 = vadd.f32 %v765, %v772
        %v805 = vadd.f32 %v766, %v772
        %v806 = vmax.f32 %v774, 0.0
        %v807 = vmax.f32 %v775, 0.0
        %v808 = vmax.f32 %v776, 0.0
        %v809 = vmax.f32 %v777, 0.0
        %v810 = vmax.f32 %v778, 0.0
        %v811 = vmax.f32 %v779, 0.0
        %v812 = vmax.f32 %v780, 0.0
        %v813 = vmax.f32 %v781, 0.0
        %v814 = vmax.f32 %v782, 0.0
        %v815 = vmax.f32 %v783, 0.0
        %v816 = vmax.f32 %v784, 0.0
        %v817 = vmax.f32 %v785, 0.0
        %v818 = vmax.f32 %v786, 0.0
        %v819 = vmax.f32 %v787, 0.0
        %v820 = vmax.f32 %v788, 0.0
        %v821 = vmax.f32 %v789, 0.0
        %v822 = vmax.f32 %v790, 0.0
        %v823 = vmax.f32 %v791, 0.0
        %v824 = vmax.f32 %v792, 0.0
        %v825 = vmax.f32 %v793, 0.0
        %v826 = vmax.f32 %v794, 0.0
        %v827 = vmax.f32 %v795, 0.0
        %v828 = vmax.f32 %v796, 0.0
        %v829 = vmax.f32 %v797, 0.0
        %v830 = vmax.f32 %v798, 0.0
        %v831 = vmax.f32 %v799, 0.0
        %v832 = vmax.f32 %v800, 0.0
        %v833 = vmax.f32 %v801, 0.0
        %v834 = vmax.f32 %v802, 0.0
        %v835 = vmax.f32 %v803, 0.0
        %v836 = vmax.f32 %v804, 0.0
        %v837 = vmax.f32 %v805, 0.0
        %v838 = vpack.c.bf16 %v807, %v806
        %v839 = vpack.c.bf16 %v809, %v808
        %v840 = vpack.c.bf16 %v811, %v810
        %v841 = vpack.c.bf16 %v813, %v812
        %v842 = vpack.c.bf16 %v815, %v814
        %v843 = vpack.c.bf16 %v817, %v816
        %v844 = vpack.c.bf16 %v819, %v818
        %v845 = vpack.c.bf16 %v821, %v820
        %v846 = vpack.c.bf16 %v823, %v822
        %v847 = vpack.c.bf16 %v825, %v824
        %v848 = vpack.c.bf16 %v827, %v826
        %v849 = vpack.c.bf16 %v829, %v828
        %v850 = vpack.c.bf16 %v831, %v830
        %v851 = vpack.c.bf16 %v833, %v832
        %v852 = vpack.c.bf16 %v835, %v834
        %v853 = vpack.c.bf16 %v837, %v836
        %v870 = vunpack.c.l.b16 %v838
        %v871 = vunpack.c.h.b16 %v838
        %v872 = vunpack.c.l.b16 %v839
        %v873 = vunpack.c.h.b16 %v839
        %v874 = vunpack.c.l.b16 %v840
        %v875 = vunpack.c.h.b16 %v840
        %v876 = vunpack.c.l.b16 %v841
        %v877 = vunpack.c.h.b16 %v841
        %v878 = vunpack.c.l.b16 %v842
        %v879 = vunpack.c.h.b16 %v842
        %v880 = vunpack.c.l.b16 %v843
        %v881 = vunpack.c.h.b16 %v843
        %v882 = vunpack.c.l.b16 %v844
        %v883 = vunpack.c.h.b16 %v844
        %v884 = vunpack.c.l.b16 %v845
        %v885 = vunpack.c.h.b16 %v845
        %v886 = vunpack.c.l.b16 %v846
        %v887 = vunpack.c.h.b16 %v846
        %v888 = vunpack.c.l.b16 %v847
        %v889 = vunpack.c.h.b16 %v847
        %v890 = vunpack.c.l.b16 %v848
        %v891 = vunpack.c.h.b16 %v848
        %v892 = vunpack.c.l.b16 %v849
        %v893 = vunpack.c.h.b16 %v849
        %v894 = vunpack.c.l.b16 %v850
        %v895 = vunpack.c.h.b16 %v850
        %v896 = vunpack.c.l.b16 %v851
        %v897 = vunpack.c.h.b16 %v851
        %v898 = vunpack.c.l.b16 %v852
        %v899 = vunpack.c.h.b16 %v852
        %v900 = vunpack.c.l.b16 %v853
        %v901 = vunpack.c.h.b16 %v853
        %v902 = vpack.c.b16 %v870, %v870
        %v903 = vpack.c.b16 %v871, %v871
        %v904 = vpack.c.b16 %v872, %v872
        %v905 = vpack.c.b16 %v873, %v873
        %v906 = vpack.c.b16 %v874, %v874
        %v907 = vpack.c.b16 %v875, %v875
        %v908 = vpack.c.b16 %v876, %v876
        %v909 = vpack.c.b16 %v877, %v877
        %v910 = vpack.c.b16 %v878, %v878
        %v911 = vpack.c.b16 %v879, %v879
        %v912 = vpack.c.b16 %v880, %v880
        %v913 = vpack.c.b16 %v881, %v881
        %v914 = vpack.c.b16 %v882, %v882
        %v915 = vpack.c.b16 %v883, %v883
        %v916 = vpack.c.b16 %v884, %v884
        %v917 = vpack.c.b16 %v885, %v885
        %v918 = vpack.c.b16 %v886, %v886
        %v919 = vpack.c.b16 %v887, %v887
        %v920 = vpack.c.b16 %v888, %v888
        %v921 = vpack.c.b16 %v889, %v889
        %v922 = vpack.c.b16 %v890, %v890
        %v923 = vpack.c.b16 %v891, %v891
        %v924 = vpack.c.b16 %v892, %v892
        %v925 = vpack.c.b16 %v893, %v893
        %v926 = vpack.c.b16 %v894, %v894
        %v927 = vpack.c.b16 %v895, %v895
        %v928 = vpack.c.b16 %v896, %v896
        %v929 = vpack.c.b16 %v897, %v897
        %v930 = vpack.c.b16 %v898, %v898
        %v931 = vpack.c.b16 %v899, %v899
        %v932 = vpack.c.b16 %v900, %v900
        %v933 = vpack.c.b16 %v901, %v901
        %966 = vst [vmem:[%s242] sm:$0xf] %v902
        %967 = vst [vmem:[%s242 + $0x4] sm:$0xf] %v903
        %968 = vst [vmem:[%s242 + $0x8] sm:$0xf] %v904
        %969 = vst [vmem:[%s242 + $0xc] sm:$0xf] %v905
        %970 = vst [vmem:[%s242 + $0x10] sm:$0xf] %v906
        %971 = vst [vmem:[%s242 + $0x14] sm:$0xf] %v907
        %972 = vst [vmem:[%s242 + $0x18] sm:$0xf] %v908
        %973 = vst [vmem:[%s242 + $0x1c] sm:$0xf] %v909
        %974 = vst [vmem:[%s242 + $0x20] sm:$0xf] %v910
        %975 = vst [vmem:[%s242 + $0x24] sm:$0xf] %v911
        %976 = vst [vmem:[%s242 + $0x28] sm:$0xf] %v912
        %977 = vst [vmem:[%s242 + $0x2c] sm:$0xf] %v913
        %978 = vst [vmem:[%s242 + $0x30] sm:$0xf] %v914
        %979 = vst [vmem:[%s242 + $0x34] sm:$0xf] %v915
        %980 = vst [vmem:[%s242 + $0x38] sm:$0xf] %v916
        %981 = vst [vmem:[%s242 + $0x3c] sm:$0xf] %v917
        %982 = vst [vmem:[%s242 + $0x40] sm:$0xf] %v918
        %983 = vst [vmem:[%s242 + $0x44] sm:$0xf] %v919
        %984 = vst [vmem:[%s242 + $0x48] sm:$0xf] %v920
        %985 = vst [vmem:[%s242 + $0x4c] sm:$0xf] %v921
        %986 = vst [vmem:[%s242 + $0x50] sm:$0xf] %v922
        %987 = vst [vmem:[%s242 + $0x54] sm:$0xf] %v923
        %988 = vst [vmem:[%s242 + $0x58] sm:$0xf] %v924
        %989 = vst [vmem:[%s242 + $0x5c] sm:$0xf] %v925
        %990 = vst [vmem:[%s242 + $0x60] sm:$0xf] %v926
        %991 = vst [vmem:[%s242 + $0x64] sm:$0xf] %v927
        %992 = vst [vmem:[%s242 + $0x68] sm:$0xf] %v928
        %993 = vst [vmem:[%s242 + $0x6c] sm:$0xf] %v929
        %994 = vst [vmem:[%s242 + $0x70] sm:$0xf] %v930
        %995 = vst [vmem:[%s242 + $0x74] sm:$0xf] %v931
        %996 = vst [vmem:[%s242 + $0x78] sm:$0xf] %v932
        %997 = vst [vmem:[%s242 + $0x7c] sm:$0xf] %v933
        %s998 = sand.u32 %s144, 1
        %s999 = scalar_lea.sflag [#allocation3], %s998
        %s1000 = sand.u32 %s144, 1
        %s1001 = smul.addr %s1000, 128
        %s1002 = scalar_lea.vmem [#allocation2], %s1001
        // Predicated region
        $region37: #{tpu_custom_call.1} parent=35 // pred_check
          %p1003 = pneg %p154
        $region38: #{tpu_custom_call.1} parent=35 // pred_check_branch
          %1005 = sbr.rel (%p1003) target = $region40
        $region39: #{tpu_custom_call.1} parent=35 // pred_region
          %s1006 = smul.u32 32, %s22
          %s1008 = ssub.s32 2048, 2048
          %1009 = vsyncadd %s999, %s1008
          %s1010 = sadd.s32 %s23, %s1006
          %s1011 = smul.addr %s1010, 64
          %s1012 = scalar_lea.hbm %s4, %s1011
          %s1013 = sshll.u32 %s1002, 4
          %s1014 = int_to_ptr.vmem [resolvable:$true] %s1013
          %1019 = dma.vmem_to_hbm [thread:$0]  %s1014, 2048, %s1012, %s999, 64, 64, 4
        $region40: #{tpu_custom_call.1} parent=35 // pred_fallthru
          _
      $region36: #{tpu_custom_call.1} parent=5 // pred_fallthru
        _
      %p1020 = scmp.le.s32.totalorder 2, %s13
      // Predicated region
      $region41: #{tpu_custom_call.1} parent=5 // pred_check
        %p1021 = pneg %p1020
      $region42: #{tpu_custom_call.1} parent=5 // pred_check_branch
        %1023 = sbr.rel (%p1021) target = $region44
      $region43: #{tpu_custom_call.1} parent=5 // pred_region
        %s1024 = ssub.s32 %s13, 2
        // Predicated region
        $region45: #{tpu_custom_call.1} parent=43 // pred_check
          %p1025 = pneg %p160
        $region46: #{tpu_custom_call.1} parent=43 // pred_check_branch
          %1027 = sbr.rel (%p1025) target = $region48
        $region47: #{tpu_custom_call.1} parent=43 // pred_region
          %s1028 = sand.u32 %s145, 1
          %s1029 = scalar_lea.sflag [#allocation3], %s1028
          %s1030 = sand.u32 %s145, 1
          %s1031 = smul.addr %s1030, 128
          %s1032 = scalar_lea.vmem [#allocation2], %s1031
          %1033 = dma.done %s1029, 2048
        $region48: #{tpu_custom_call.1} parent=43 // pred_fallthru
          _
      $region44: #{tpu_custom_call.1} parent=5 // pred_fallthru
        _
    $region6: #{tpu_custom_call.1} parent=1 // loop_footer
      %s17 = sadd.s32 1, %s13
    $region7: #{tpu_custom_call.1} parent=1 // loop_footer_branch
      %12 = sbr.rel target = $region3
    $region8: #{tpu_custom_call.1} parent=1 // loop_exit
      _
    %1034 = vsyncpa [#allocation3], 1
    %s1035 = scalar_lea.sflag [#allocation3], 1
    %1036 = vsyncpa %s1035, 1

</llo_original>
